<compile_context>
chip_gen: v7x
topology: tpu7x:2x2x1
jax: 0.10.0
libtpu: 0.0.40
codegen_flags: <defaults>
</compile_context>

<pallas_src>
import jax
import jax.numpy as jnp
from jax import lax
from jax.experimental import pallas as pl
from jax.experimental.pallas import tpu as pltpu


def _round_up(x, m):
    return (x + m - 1) // m * m


def mlp_kernel(a_ref, x_ref, w1_ref, b1_ref, w2_ref, b2_ref, w3_ref, b3_ref,
               oT_ref):
    # a_ref: SMEM (2,) PReLU slopes (scalar-prefetched).
    a1 = a_ref[0]
    a2 = a_ref[1]

    # x block arrives in its native (TB, in_dim) layout: no HBM transpose in
    # the wrapper.  The NT contraction below computes w1 @ x^T, which puts the
    # batch on the lane axis for all intermediates and the output store.
    xb = x_ref[...].astype(jnp.float32)                        # (TB, in_dim)

    # Layer 1: (latent, in_dim) x (TB, in_dim)^T -> (latent, TB), f32 acc.
    h = lax.dot_general(w1_ref[...], xb,
                        dimension_numbers=(((1,), (1,)), ((), ())),
                        preferred_element_type=jnp.float32)
    h = h + b1_ref[...]
    h = jnp.where(h > 0, h, a1 * h)

    # Layer 2: (latent, latent) @ (latent, TB) -> (latent, TB); h stays f32.
    h = jnp.dot(w2_ref[...], h, preferred_element_type=jnp.float32) + b2_ref[...]
    h = jnp.where(h > 0, h, a2 * h)

    # Layer 3: (out_dim, latent) @ (latent, TB) -> (out_dim, TB), no activation.
    o = jnp.dot(w3_ref[...], h, preferred_element_type=jnp.float32) + b3_ref[...]
    oT_ref[...] = o.astype(oT_ref.dtype)


def _choose_batch_tile(B, block_batch):
    """Pick a lane-dense batch tile: block == full array for tiny B (always a
    legal BlockSpec), otherwise a multiple of 128 sized so the grid has >= 2
    steps (v7x megacore) and the last partial tile wastes < ~128 rows/step."""
    max_tb = max(128, _round_up(min(block_batch, 8192), 128))   # VMEM lane-pad cap
    if B <= 256:
        return B                                  # grid = (1,), block == array
    n_steps = max(2, pl.cdiv(_round_up(B, 128), max_tb))
    tb = min(_round_up(pl.cdiv(B, n_steps), 128), max_tb)
    return tb


def mlp_forward(x, params, *, block_batch=8192, return_transposed=False):
    """x: (B, input_dim) in its native layout.  params: torch-layout weights
    (out_f, in_f) and biases (out_f, 1).  Returns (B, out_dim), or (out_dim, B)
    when return_transposed=True (no output transpose pass at all)."""
    B, in_dim = x.shape
    latent = params["w1"].shape[0]
    out_dim = params["w3"].shape[0]
    out_dtype = x.dtype

    TB = _choose_batch_tile(B, block_batch)
    grid = (pl.cdiv(B, TB),)

    # Weights/biases are tiny and stay resident in VMEM (constant index maps).
    w1 = params["w1"].astype(jnp.float32)
    w2 = params["w2"].astype(jnp.float32)
    w3 = params["w3"].astype(jnp.float32)
    b1 = params["b1"].astype(jnp.float32)
    b2 = params["b2"].astype(jnp.float32)
    b3 = params["b3"].astype(jnp.float32)
    slopes = jnp.stack([params["a1"], params["a2"]]).astype(jnp.float32)  # (2,)

    const = lambda i, s: (0, 0)       # resident weights / biases
    x_tile = lambda i, s: (i, 0)      # stream native-layout x along the batch
    o_tile = lambda i, s: (0, i)      # lane-dense (out_dim, TB) output blocks

    oT = pl.pallas_call(
        mlp_kernel,
        out_shape=jax.ShapeDtypeStruct((out_dim, B), out_dtype),
        grid_spec=pltpu.PrefetchScalarGridSpec(
            num_scalar_prefetch=1,
            grid=grid,
            in_specs=[
                pl.BlockSpec((TB, in_dim), x_tile),          # x (native layout)
                pl.BlockSpec((latent, in_dim), const),       # w1
                pl.BlockSpec((latent, 1), const),            # b1
                pl.BlockSpec((latent, latent), const),       # w2
                pl.BlockSpec((latent, 1), const),            # b2
                pl.BlockSpec((out_dim, latent), const),      # w3
                pl.BlockSpec((out_dim, 1), const),           # b3
            ],
            out_specs=pl.BlockSpec((out_dim, TB), o_tile),
        ),
        compiler_params=pltpu.CompilerParams(
            dimension_semantics=("parallel",),
            vmem_limit_bytes=32 * 1024 * 1024,
        ),
    )(slopes, x, w1, b1, w2, b2, w3, b3)

    if return_transposed:
        return oT                       # (out_dim, B) — fastest API boundary
    # Small (out_dim x B) transpose; fuses into the consumer under jit.
    return oT.T                         # (B, out_dim), matches nn.Module output


def init_params(key, input_dim, latent_dim, output_dim):
    """Deterministic init mimicking torch.nn.Linear default U(-1/sqrt(fan_in), +)."""
    def linear(k, fan_in, fan_out):
        kw, kb = jax.random.split(k)
        bound = 1.0 / jnp.sqrt(fan_in)
        w = jax.random.uniform(kw, (fan_out, fan_in), jnp.float32, -bound, bound)
        b = jax.random.uniform(kb, (fan_out, 1), jnp.float32, -bound, bound)
        return w, b

    k1, k2, k3 = jax.random.split(key, 3)
    w1, b1 = linear(k1, input_dim, latent_dim)
    w2, b2 = linear(k2, latent_dim, latent_dim)
    w3, b3 = linear(k3, latent_dim, output_dim)
    return {
        "w1": w1, "b1": b1, "a1": jnp.float32(0.25),   # nn.PReLU default slope
        "w2": w2, "b2": b2, "a2": jnp.float32(0.25),
        "w3": w3, "b3": b3,
    }


def mlp_reference(x, p):
    """Pure-JAX f32 reference."""
    def prelu(h, a):
        return jnp.where(h > 0, h, a * h)

    h = prelu(x.astype(jnp.float32) @ p["w1"].T + p["b1"].T, p["a1"])
    h = prelu(h @ p["w2"].T + p["b2"].T, p["a2"])
    return (h @ p["w3"].T + p["b3"].T).astype(x.dtype)


if __name__ == "__main__":
    input_dim, latent_dim, output_dim = 16, 32, 8

    key = jax.random.PRNGKey(0)
    kx, kp, kx2 = jax.random.split(key, 3)
    params = init_params(kp, input_dim, latent_dim, output_dim)

    # 1) Tiny batch: single grid step, block == full array.
    x = jax.random.normal(kx, (8, input_dim), jnp.float32)
    out = jax.block_until_ready(mlp_forward(x, params))
    ref = mlp_reference(x, params)
    assert out.shape == (8, output_dim)
    assert jnp.allclose(out, ref, atol=1e-5, rtol=1e-5), "small-batch mismatch"

    # 2) Multi-tile grid with a partial last tile (B=300 -> TB=256, grid=(2,)).
    x2 = jax.random.normal(kx2, (300, input_dim), jnp.float32)
    out2 = jax.block_until_ready(mlp_forward(x2, params))
    ref2 = mlp_reference(x2, params)
    assert out2.shape == (300, output_dim)
    assert jnp.allclose(out2, ref2, atol=1e-5, rtol=1e-5), "multi-tile mismatch"

    # 3) Transposed-output fast path (no boundary transpose at all).
    out3 = jax.block_until_ready(mlp_forward(x2, params, return_transposed=True))
    assert out3.shape == (output_dim, 300)
    assert jnp.allclose(out3, ref2.T, atol=1e-5, rtol=1e-5), "transposed-out mismatch"

    print("KERNEL_OK")
</pallas_src>

<mosaic_0001>
module attributes {stable_mosaic.version = 11 : i64} {
  func.func @mlp_kernel(%arg0: i32, %arg1: memref<2xf32, #tpu.memory_space<smem>>, %arg2: memref<8x16xf32, #tpu.memory_space<vmem>>, %arg3: memref<32x16xf32, #tpu.memory_space<vmem>>, %arg4: memref<32x1xf32, #tpu.memory_space<vmem>>, %arg5: memref<32x32xf32, #tpu.memory_space<vmem>>, %arg6: memref<32x1xf32, #tpu.memory_space<vmem>>, %arg7: memref<8x32xf32, #tpu.memory_space<vmem>>, %arg8: memref<8x1xf32, #tpu.memory_space<vmem>>, %arg9: memref<8x8xf32, #tpu.memory_space<vmem>>) attributes {dimension_semantics = [#tpu.dimension_semantics<parallel>], iteration_bounds = array<i64: 1>, scalar_prefetch = 1 : i64, scratch_operands = 0 : i64, tpu.core_type = #tpu.core_type<tc>, window_params = [{transform_indices = @transform_0, window_bounds = array<i64: 8, 16>}, {pipeline_mode = #tpu.pipeline_mode<synchronous>, transform_indices = @transform_1, window_bounds = array<i64: 32, 16>}, {pipeline_mode = #tpu.pipeline_mode<synchronous>, transform_indices = @transform_2, window_bounds = array<i64: 32, 1>}, {pipeline_mode = #tpu.pipeline_mode<synchronous>, transform_indices = @transform_3, window_bounds = array<i64: 32, 32>}, {pipeline_mode = #tpu.pipeline_mode<synchronous>, transform_indices = @transform_4, window_bounds = array<i64: 32, 1>}, {pipeline_mode = #tpu.pipeline_mode<synchronous>, transform_indices = @transform_5, window_bounds = array<i64: 8, 32>}, {pipeline_mode = #tpu.pipeline_mode<synchronous>, transform_indices = @transform_6, window_bounds = array<i64: 8, 1>}, {transform_indices = @transform_7, window_bounds = array<i64: 8, 8>}]} {
    %c0 = arith.constant 0 : index
    %0 = memref.load %arg1[%c0] : memref<2xf32, #tpu.memory_space<smem>>
    %c1 = arith.constant 1 : index
    %1 = memref.load %arg1[%c1] : memref<2xf32, #tpu.memory_space<smem>>
    %c0_0 = arith.constant 0 : index
    %c0_1 = arith.constant 0 : index
    %2 = vector.load %arg2[%c0_0, %c0_1] : memref<8x16xf32, #tpu.memory_space<vmem>>, vector<8x16xf32>
    %c0_2 = arith.constant 0 : index
    %c0_3 = arith.constant 0 : index
    %3 = vector.load %arg3[%c0_2, %c0_3] : memref<32x16xf32, #tpu.memory_space<vmem>>, vector<32x16xf32>
    %cst = arith.constant dense<0.000000e+00> : vector<32x8xf32>
    %4 = tpu.matmul %3, %2, %cst {dimension_numbers = #tpu.dot_dimension_numbers<[1], [1], [0], [0], [0, 0, 1, 0], [], []>} : vector<32x16xf32>, vector<8x16xf32>, vector<32x8xf32> -> vector<32x8xf32>
    %c0_4 = arith.constant 0 : index
    %c0_5 = arith.constant 0 : index
    %5 = vector.load %arg4[%c0_4, %c0_5] : memref<32x1xf32, #tpu.memory_space<vmem>>, vector<32x1xf32>
    %6 = vector.broadcast %5 : vector<32x1xf32> to vector<32x8xf32>
    %7 = arith.addf %4, %6 : vector<32x8xf32>
    %cst_6 = arith.constant 0.000000e+00 : f32
    %8 = vector.broadcast %cst_6 : f32 to vector<32x8xf32>
    %9 = arith.cmpf ogt, %7, %8 : vector<32x8xf32>
    %10 = vector.broadcast %0 : f32 to vector<32x8xf32>
    %11 = arith.mulf %10, %7 : vector<32x8xf32>
    %12 = arith.select %9, %7, %11 : vector<32x8xi1>, vector<32x8xf32>
    %c0_7 = arith.constant 0 : index
    %c0_8 = arith.constant 0 : index
    %13 = vector.load %arg5[%c0_7, %c0_8] : memref<32x32xf32, #tpu.memory_space<vmem>>, vector<32x32xf32>
    %cst_9 = arith.constant dense<0.000000e+00> : vector<32x8xf32>
    %14 = tpu.matmul %13, %12, %cst_9 {dimension_numbers = #tpu.dot_dimension_numbers<[1], [0], [0], [1], [0, 0, 1, 1], [], []>} : vector<32x32xf32>, vector<32x8xf32>, vector<32x8xf32> -> vector<32x8xf32>
    %c0_10 = arith.constant 0 : index
    %c0_11 = arith.constant 0 : index
    %15 = vector.load %arg6[%c0_10, %c0_11] : memref<32x1xf32, #tpu.memory_space<vmem>>, vector<32x1xf32>
    %16 = vector.broadcast %15 : vector<32x1xf32> to vector<32x8xf32>
    %17 = arith.addf %14, %16 : vector<32x8xf32>
    %cst_12 = arith.constant 0.000000e+00 : f32
    %18 = vector.broadcast %cst_12 : f32 to vector<32x8xf32>
    %19 = arith.cmpf ogt, %17, %18 : vector<32x8xf32>
    %20 = vector.broadcast %1 : f32 to vector<32x8xf32>
    %21 = arith.mulf %20, %17 : vector<32x8xf32>
    %22 = arith.select %19, %17, %21 : vector<32x8xi1>, vector<32x8xf32>
    %c0_13 = arith.constant 0 : index
    %c0_14 = arith.constant 0 : index
    %23 = vector.load %arg7[%c0_13, %c0_14] : memref<8x32xf32, #tpu.memory_space<vmem>>, vector<8x32xf32>
    %cst_15 = arith.constant dense<0.000000e+00> : vector<8x8xf32>
    %24 = tpu.matmul %23, %22, %cst_15 {dimension_numbers = #tpu.dot_dimension_numbers<[1], [0], [0], [1], [0, 0, 1, 1], [], []>} : vector<8x32xf32>, vector<32x8xf32>, vector<8x8xf32> -> vector<8x8xf32>
    %c0_16 = arith.constant 0 : index
    %c0_17 = arith.constant 0 : index
    %25 = vector.load %arg8[%c0_16, %c0_17] : memref<8x1xf32, #tpu.memory_space<vmem>>, vector<8x1xf32>
    %26 = vector.broadcast %25 : vector<8x1xf32> to vector<8x8xf32>
    %27 = arith.addf %24, %26 : vector<8x8xf32>
    %c0_18 = arith.constant 0 : index
    %c0_19 = arith.constant 0 : index
    %28 = vector.load %arg9[%c0_18, %c0_19] : memref<8x8xf32, #tpu.memory_space<vmem>>, vector<8x8xf32>
    tpu.vector_store %arg9[%c0_18, %c0_19], %27 {strides = array<i32>} : memref<8x8xf32, #tpu.memory_space<vmem>>, vector<8x8xf32>,
    return
  }
  func.func @transform_0(%arg0: i32, %arg1: memref<2xf32, #tpu.memory_space<smem>>) -> (i32, i32) {
    %c0_i32 = arith.constant 0 : i32
    %c0_i32_0 = arith.constant 0 : i32
    return %arg0, %c0_i32 : i32, i32
  }
  func.func @transform_1(%arg0: i32, %arg1: memref<2xf32, #tpu.memory_space<smem>>) -> (i32, i32) {
    %c0_i32 = arith.constant 0 : i32
    %c0_i32_0 = arith.constant 0 : i32
    %c0_i32_1 = arith.constant 0 : i32
    return %c0_i32, %c0_i32_0 : i32, i32
  }
  func.func @transform_2(%arg0: i32, %arg1: memref<2xf32, #tpu.memory_space<smem>>) -> (i32, i32) {
    %c0_i32 = arith.constant 0 : i32
    %c0_i32_0 = arith.constant 0 : i32
    %c0_i32_1 = arith.constant 0 : i32
    return %c0_i32, %c0_i32_0 : i32, i32
  }
  func.func @transform_3(%arg0: i32, %arg1: memref<2xf32, #tpu.memory_space<smem>>) -> (i32, i32) {
    %c0_i32 = arith.constant 0 : i32
    %c0_i32_0 = arith.constant 0 : i32
    %c0_i32_1 = arith.constant 0 : i32
    return %c0_i32, %c0_i32_0 : i32, i32
  }
  func.func @transform_4(%arg0: i32, %arg1: memref<2xf32, #tpu.memory_space<smem>>) -> (i32, i32) {
    %c0_i32 = arith.constant 0 : i32
    %c0_i32_0 = arith.constant 0 : i32
    %c0_i32_1 = arith.constant 0 : i32
    return %c0_i32, %c0_i32_0 : i32, i32
  }
  func.func @transform_5(%arg0: i32, %arg1: memref<2xf32, #tpu.memory_space<smem>>) -> (i32, i32) {
    %c0_i32 = arith.constant 0 : i32
    %c0_i32_0 = arith.constant 0 : i32
    %c0_i32_1 = arith.constant 0 : i32
    return %c0_i32, %c0_i32_0 : i32, i32
  }
  func.func @transform_6(%arg0: i32, %arg1: memref<2xf32, #tpu.memory_space<smem>>) -> (i32, i32) {
    %c0_i32 = arith.constant 0 : i32
    %c0_i32_0 = arith.constant 0 : i32
    %c0_i32_1 = arith.constant 0 : i32
    return %c0_i32, %c0_i32_0 : i32, i32
  }
  func.func @transform_7(%arg0: i32, %arg1: memref<2xf32, #tpu.memory_space<smem>>) -> (i32, i32) {
    %c0_i32 = arith.constant 0 : i32
    %c0_i32_0 = arith.constant 0 : i32
    return %c0_i32, %arg0 : i32, i32
  }
}

</mosaic_0001>

<llo_original>
// kernel: tpu_custom_call.1
$region0: #{tpu_custom_call.1}
  #allocation0 [shape = 'u32[]', space=smem, size = 0x4, offset = 0x4, fixed_abs, tag = 'smem constant byte address 0x4 - core index']
  #allocation1 [shape = 'u32[144,128]{1,0:T(1,128)}', space=vmem, size = 0x12000, scoped, tag = 'internal scratch']
  #allocation2 [shape = 's32[1]{0}', space=sflag, size = 0x4, scoped, tag = 'scoped memory for tpu_custom_call.1']
  #allocation3 [shape = 'u8[512]{0}', space=smem, size = 0x200, scoped, tag = 'prefetched SMEM operand 0']
  %s0 = inlined_call_operand.vmem [shape: f32[2], index: 0, kind: input, shape index: {}]
  %s1 = inlined_call_operand.vmem [shape: f32[8,16], index: 1, kind: input, shape index: {}]
  %s2 = inlined_call_operand.vmem [shape: f32[32,16], index: 2, kind: input, shape index: {}]
  %s3 = inlined_call_operand.vmem [shape: f32[32,1], index: 3, kind: input, shape index: {}]
  %s4 = inlined_call_operand.vmem [shape: f32[32,32], index: 4, kind: input, shape index: {}]
  %s5 = inlined_call_operand.vmem [shape: f32[32,1], index: 5, kind: input, shape index: {}]
  %s6 = inlined_call_operand.vmem [shape: f32[8,32], index: 6, kind: input, shape index: {}]
  %s7 = inlined_call_operand.vmem [shape: f32[8,1], index: 7, kind: input, shape index: {}]
  %s8 = inlined_call_operand.hbm [shape: f32[8,8], index: 8, kind: output, shape index: {}]
  %s9 = sld [smem:[#allocation0]]
  $region38: #{tpu_custom_call.1} parent=0
    _
  %s11 = ssub.s32 1, %s9
  %s12 = scalar_select 0, %s11, %s9
  %s13 = sshll.u32 %s0, 4
  %s14 = int_to_ptr.vmem [resolvable:$true] %s13
  %16 = dma.vmem_to_smem %s14, 16, [#allocation3], [#allocation2]
  %17 = dma.done [#allocation2], 16
  %18 = sfence
  $region1: #{tpu_custom_call.1} parent=0
    #allocation4 [shape = 'u8[4096]{0}', space=vmem, size = 0x1000, scoped, tag = 'output window, operand 0, single buffered']
    #allocation5 [shape = 's32[1]{0}', space=sflag, size = 0x4, scoped, tag = 'scoped memory for tpu_custom_call.1']
    %19 = vsyncpa [#allocation5], 0
    // Predicated region
    $region2: #{tpu_custom_call.1} parent=1 // pred_check
      _
    $region3: #{tpu_custom_call.1} parent=1 // pred_check_branch
      %21 = sbr.rel (0) target = $region5
    $region4: #{tpu_custom_call.1} parent=1 // pred_region
      _
    $region5: #{tpu_custom_call.1} parent=1 // pred_fallthru
      _
    // Predicated region
    $region6: #{tpu_custom_call.1} parent=1 // pred_check
      _
    $region7: #{tpu_custom_call.1} parent=1 // pred_check_branch
      %23 = sbr.rel (0) target = $region9
    $region8: #{tpu_custom_call.1} parent=1 // pred_region
      _
    $region9: #{tpu_custom_call.1} parent=1 // pred_fallthru
      _
    // Predicated region
    $region10: #{tpu_custom_call.1} parent=1 // pred_check
      _
    $region11: #{tpu_custom_call.1} parent=1 // pred_check_branch
      %25 = sbr.rel (0) target = $region13
    $region12: #{tpu_custom_call.1} parent=1 // pred_region
      _
    $region13: #{tpu_custom_call.1} parent=1 // pred_fallthru
      _
    // Predicated region
    $region14: #{tpu_custom_call.1} parent=1 // pred_check
      _
    $region15: #{tpu_custom_call.1} parent=1 // pred_check_branch
      %27 = sbr.rel (0) target = $region17
    $region16: #{tpu_custom_call.1} parent=1 // pred_region
      _
    $region17: #{tpu_custom_call.1} parent=1 // pred_fallthru
      _
    // Predicated region
    $region18: #{tpu_custom_call.1} parent=1 // pred_check
      _
    $region19: #{tpu_custom_call.1} parent=1 // pred_check_branch
      %29 = sbr.rel (0) target = $region21
    $region20: #{tpu_custom_call.1} parent=1 // pred_region
      _
    $region21: #{tpu_custom_call.1} parent=1 // pred_fallthru
      _
    // Predicated region
    $region22: #{tpu_custom_call.1} parent=1 // pred_check
      _
    $region23: #{tpu_custom_call.1} parent=1 // pred_check_branch
      %31 = sbr.rel (0) target = $region25
    $region24: #{tpu_custom_call.1} parent=1 // pred_region
      _
    $region25: #{tpu_custom_call.1} parent=1 // pred_fallthru
      _
    // Predicated region
    $region26: #{tpu_custom_call.1} parent=1 // pred_check
      _
    $region27: #{tpu_custom_call.1} parent=1 // pred_check_branch
      %33 = sbr.rel (0) target = $region29
    $region28: #{tpu_custom_call.1} parent=1 // pred_region
      _
    $region29: #{tpu_custom_call.1} parent=1 // pred_fallthru
      _
    %s34 = sld [smem:[#allocation3]]
    %s35 = sld [smem:[#allocation3 + $0x1]]
    %v36 = vld [vmem:[%s1] sm:$0xff]
    %v37 = vld [vmem:[%s2] sm:$0xff]
    %v38 = vld [vmem:[%s2 + $0x8] sm:$0xff]
    %v39 = vld [vmem:[%s2 + $0x10] sm:$0xff]
    %v40 = vld [vmem:[%s2 + $0x18] sm:$0xff]
    %v41 = vld [vmem:[%s3] sm:$0xff]
    %v42 = vld [vmem:[%s3 + $0x8] sm:$0xff]
    %v43 = vld [vmem:[%s3 + $0x10] sm:$0xff]
    %v44 = vld [vmem:[%s3 + $0x18] sm:$0xff]
    %46 = vset.pattern.permute.xlu0 0
    %47 = vperm.xlu0 %46, %v41
    %v48 = vpop.permute.xlu0 %47
    %51 = vset.pattern.permute.xlu0 0
    %52 = vperm.xlu0 %51, %v42
    %v53 = vpop.permute.xlu0 %52
    %56 = vset.pattern.permute.xlu0 0
    %57 = vperm.xlu0 %56, %v43
    %v58 = vpop.permute.xlu0 %57
    %61 = vset.pattern.permute.xlu0 0
    %62 = vperm.xlu0 %61, %v44
    %v63 = vpop.permute.xlu0 %62
    %vm65 = vcmask 130048
    %v67 = vsel %vm65, %v37, 0
    %v70 = vsel %vm65, %v38, 0
    %v73 = vsel %vm65, %v39, 0
    %v76 = vsel %vm65, %v40, 0
    %v79 = vsel %vm65, %v36, 0
    %81 = vmatprep.subr.mxu0 0.0
    %82 = vmatpush1.xpose.msra.mxu0 %v79
    %83 = vmatprep.subr.mxu0 0.0
    %84 = vmatpush1.xpose.msra.mxu0 0.0
    %85 = vmatprep.subr.mxu0 0.0
    %86 = vmatpush1.xpose.msra.mxu0 0.0
    %87 = vmatprep.subr.mxu0 0.0
    %88 = vmatpush1.xpose.msra.mxu0 0.0
    %89 = vmatprep.subr.mxu0 0.0
    %90 = vmatpush1.xpose.msra.mxu0 0.0
    %91 = vmatprep.subr.mxu0 0.0
    %92 = vmatpush1.xpose.msra.mxu0 0.0
    %93 = vmatprep.subr.mxu0 0.0
    %94 = vmatpush1.xpose.msra.mxu0 0.0
    %95 = vmatprep.subr.mxu0 0.0
    %96 = vmatpush1.xpose.msra.mxu0 0.0
    %97 = vmatprep.subr.mxu0 0.0
    %98 = vmatpush1.xpose.msra.mxu0 0.0
    %99 = vmatprep.subr.mxu0 0.0
    %100 = vmatpush1.xpose.msra.mxu0 0.0
    %101 = vmatprep.subr.mxu0 0.0
    %102 = vmatpush1.xpose.msra.mxu0 0.0
    %103 = vmatprep.subr.mxu0 0.0
    %104 = vmatpush1.xpose.msra.mxu0 0.0
    %105 = vmatprep.subr.mxu0 0.0
    %106 = vmatpush1.xpose.msra.mxu0 0.0
    %107 = vmatprep.subr.mxu0 0.0
    %108 = vmatpush1.xpose.msra.mxu0 0.0
    %109 = vmatprep.subr.mxu0 0.0
    %110 = vmatpush1.xpose.msra.mxu0 0.0
    %111 = vmatprep.subr.mxu0 0.0
    %112 = vmatpush1.xpose.msra.mxu0 0.0
    %113 = vmatprep.subr.mxu0 0.0
    %114 = vmatpush1.xpose.msra.mxu0 0.0
    %115 = vmatprep.subr.mxu0 0.0
    %116 = vmatpush1.xpose.msra.mxu0 0.0
    %117 = vmatprep.subr.mxu0 0.0
    %118 = vmatpush1.xpose.msra.mxu0 0.0
    %119 = vmatprep.subr.mxu0 0.0
    %120 = vmatpush1.xpose.msra.mxu0 0.0
    %121 = vmatprep.subr.mxu0 0.0
    %122 = vmatpush1.xpose.msra.mxu0 0.0
    %123 = vmatprep.subr.mxu0 0.0
    %124 = vmatpush1.xpose.msra.mxu0 0.0
    %125 = vmatprep.subr.mxu0 0.0
    %126 = vmatpush1.xpose.msra.mxu0 0.0
    %127 = vmatprep.subr.mxu0 0.0
    %128 = vmatpush1.xpose.msra.mxu0 0.0
    %129 = vmatprep.subr.mxu0 0.0
    %130 = vmatpush1.xpose.msra.mxu0 0.0
    %131 = vmatprep.subr.mxu0 0.0
    %132 = vmatpush1.xpose.msra.mxu0 0.0
    %133 = vmatprep.subr.mxu0 0.0
    %134 = vmatpush1.xpose.msra.mxu0 0.0
    %135 = vmatprep.subr.mxu0 0.0
    %136 = vmatpush1.xpose.msra.mxu0 0.0
    %137 = vmatprep.subr.mxu0 0.0
    %138 = vmatpush1.xpose.msra.mxu0 0.0
    %139 = vmatprep.subr.mxu0 0.0
    %140 = vmatpush1.xpose.msra.mxu0 0.0
    %141 = vmatprep.subr.mxu0 0.0
    %142 = vmatpush1.xpose.msra.mxu0 0.0
    %143 = vmatprep.subr.mxu0 0.0
    %144 = vmatpush1.xpose.msra.mxu0 0.0
    %145 = vmatprep.mubr.f32.mxu0 0.0
    %146 = vmatmul.mubr.f32.gmra.mrb[0].mxu0 %v67
    %v147 = vpop.f32.mrb[0].mxu0
    %v148 = vadd.f32 %v48, %v147
    %v149 = vpop.f32.mrb[0].mxu0
    %150 = vmatprep.mubr.f32.mxu0 0.0
    %151 = vmatmul.mubr.f32.gmra.mrb[0].mxu0 %v70
    %v152 = vpop.f32.mrb[0].mxu0
    %v153 = vadd.f32 %v53, %v152
    %v154 = vpop.f32.mrb[0].mxu0
    %155 = vmatprep.mubr.f32.mxu0 0.0
    %156 = vmatmul.mubr.f32.gmra.mrb[0].mxu0 %v73
    %v157 = vpop.f32.mrb[0].mxu0
    %v158 = vadd.f32 %v58, %v157
    %v159 = vpop.f32.mrb[0].mxu0
    %160 = vmatprep.mubr.f32.mxu0 0.0
    %161 = vmatmul.mubr.f32.gmra.mrb[0].mxu0 %v76
    %v162 = vpop.f32.mrb[0].mxu0
    %v163 = vadd.f32 %v63, %v162
    %v164 = vpop.f32.mrb[0].mxu0
    %165 = vdwg.mxu0
    %vm166 = vcmp.gt.f32.partialorder %v148, 0.0
    %vm167 = vcmp.gt.f32.partialorder %v153, 0.0
    %vm168 = vcmp.gt.f32.partialorder %v158, 0.0
    %vm169 = vcmp.gt.f32.partialorder %v163, 0.0
    %v170 = vstv %s34
    %v171 = vmul.f32 %v170, %v148
    %v172 = vmul.f32 %v170, %v153
    %v173 = vmul.f32 %v170, %v158
    %v174 = vmul.f32 %v170, %v163
    %v175 = vsel %vm166, %v148, %v171
    %v176 = vsel %vm167, %v153, %v172
    %v177 = vsel %vm168, %v158, %v173
    %v178 = vsel %vm169, %v163, %v174
    %v179 = vld [vmem:[%s4] sm:$0xff]
    %v180 = vld [vmem:[%s4 + $0x8] sm:$0xff]
    %v181 = vld [vmem:[%s4 + $0x10] sm:$0xff]
    %v182 = vld [vmem:[%s4 + $0x18] sm:$0xff]
    %v183 = vld [vmem:[%s5] sm:$0xff]
    %v184 = vld [vmem:[%s5 + $0x8] sm:$0xff]
    %v185 = vld [vmem:[%s5 + $0x10] sm:$0xff]
    %v186 = vld [vmem:[%s5 + $0x18] sm:$0xff]
    %188 = vset.pattern.permute.xlu0 0
    %189 = vperm.xlu0 %188, %v183
    %v190 = vpop.permute.xlu0 %189
    %193 = vset.pattern.permute.xlu0 0
    %194 = vperm.xlu0 %193, %v184
    %v195 = vpop.permute.xlu0 %194
    %198 = vset.pattern.permute.xlu0 0
    %199 = vperm.xlu0 %198, %v185
    %v200 = vpop.permute.xlu0 %199
    %203 = vset.pattern.permute.xlu0 0
    %204 = vperm.xlu0 %203, %v186
    %v205 = vpop.permute.xlu0 %204
    %vm207 = vcmask 261120
    %v209 = vsel %vm207, %v179, 0
    %v212 = vsel %vm207, %v180, 0
    %v215 = vsel %vm207, %v181, 0
    %v218 = vsel %vm207, %v182, 0
    %220 = vmatprep.subr.mxu0 0.0
    %221 = vmatpush1.msra.mxu0 %v175
    %222 = vmatprep.subr.mxu0 0.0
    %223 = vmatpush1.msra.mxu0 %v176
    %224 = vmatprep.subr.mxu0 0.0
    %225 = vmatpush1.msra.mxu0 %v177
    %226 = vmatprep.subr.mxu0 0.0
    %227 = vmatpush1.msra.mxu0 %v178
    %228 = vmatprep.subr.mxu0 0.0
    %229 = vmatpush1.msra.mxu0 0.0
    %230 = vmatprep.subr.mxu0 0.0
    %231 = vmatpush1.msra.mxu0 0.0
    %232 = vmatprep.subr.mxu0 0.0
    %233 = vmatpush1.msra.mxu0 0.0
    %234 = vmatprep.subr.mxu0 0.0
    %235 = vmatpush1.msra.mxu0 0.0
    %236 = vmatprep.subr.mxu0 0.0
    %237 = vmatpush1.msra.mxu0 0.0
    %238 = vmatprep.subr.mxu0 0.0
    %239 = vmatpush1.msra.mxu0 0.0
    %240 = vmatprep.subr.mxu0 0.0
    %241 = vmatpush1.msra.mxu0 0.0
    %242 = vmatprep.subr.mxu0 0.0
    %243 = vmatpush1.msra.mxu0 0.0
    %244 = vmatprep.subr.mxu0 0.0
    %245 = vmatpush1.msra.mxu0 0.0
    %246 = vmatprep.subr.mxu0 0.0
    %247 = vmatpush1.msra.mxu0 0.0
    %248 = vmatprep.subr.mxu0 0.0
    %249 = vmatpush1.msra.mxu0 0.0
    %250 = vmatprep.subr.mxu0 0.0
    %251 = vmatpush1.msra.mxu0 0.0
    %252 = vmatprep.subr.mxu0 0.0
    %253 = vmatpush1.msra.mxu0 0.0
    %254 = vmatprep.subr.mxu0 0.0
    %255 = vmatpush1.msra.mxu0 0.0
    %256 = vmatprep.subr.mxu0 0.0
    %257 = vmatpush1.msra.mxu0 0.0
    %258 = vmatprep.subr.mxu0 0.0
    %259 = vmatpush1.msra.mxu0 0.0
    %260 = vmatprep.subr.mxu0 0.0
    %261 = vmatpush1.msra.mxu0 0.0
    %262 = vmatprep.subr.mxu0 0.0
    %263 = vmatpush1.msra.mxu0 0.0
    %264 = vmatprep.subr.mxu0 0.0
    %265 = vmatpush1.msra.mxu0 0.0
    %266 = vmatprep.subr.mxu0 0.0
    %267 = vmatpush1.msra.mxu0 0.0
    %268 = vmatprep.subr.mxu0 0.0
    %269 = vmatpush1.msra.mxu0 0.0
    %270 = vmatprep.subr.mxu0 0.0
    %271 = vmatpush1.msra.mxu0 0.0
    %272 = vmatprep.subr.mxu0 0.0
    %273 = vmatpush1.msra.mxu0 0.0
    %274 = vmatprep.subr.mxu0 0.0
    %275 = vmatpush1.msra.mxu0 0.0
    %276 = vmatprep.subr.mxu0 0.0
    %277 = vmatpush1.msra.mxu0 0.0
    %278 = vmatprep.subr.mxu0 0.0
    %279 = vmatpush1.msra.mxu0 0.0
    %280 = vmatprep.subr.mxu0 0.0
    %281 = vmatpush1.msra.mxu0 0.0
    %282 = vmatprep.subr.mxu0 0.0
    %283 = vmatpush1.msra.mxu0 0.0
    %284 = vmatprep.mubr.f32.mxu0 0.0
    %285 = vmatmul.mubr.f32.gmra.mrb[0].mxu0 %v209
    %v286 = vpop.f32.mrb[0].mxu0
    %v287 = vadd.f32 %v190, %v286
    %v288 = vpop.f32.mrb[0].mxu0
    %289 = vmatprep.mubr.f32.mxu0 0.0
    %290 = vmatmul.mubr.f32.gmra.mrb[0].mxu0 %v212
    %v291 = vpop.f32.mrb[0].mxu0
    %v292 = vadd.f32 %v195, %v291
    %v293 = vpop.f32.mrb[0].mxu0
    %294 = vmatprep.mubr.f32.mxu0 0.0
    %295 = vmatmul.mubr.f32.gmra.mrb[0].mxu0 %v215
    %v296 = vpop.f32.mrb[0].mxu0
    %v297 = vadd.f32 %v200, %v296
    %v298 = vpop.f32.mrb[0].mxu0
    %299 = vmatprep.mubr.f32.mxu0 0.0
    %300 = vmatmul.mubr.f32.gmra.mrb[0].mxu0 %v218
    %v301 = vpop.f32.mrb[0].mxu0
    %v302 = vadd.f32 %v205, %v301
    %v303 = vpop.f32.mrb[0].mxu0
    %304 = vdwg.mxu0
    %vm305 = vcmp.gt.f32.partialorder %v287, 0.0
    %vm306 = vcmp.gt.f32.partialorder %v292, 0.0
    %vm307 = vcmp.gt.f32.partialorder %v297, 0.0
    %vm308 = vcmp.gt.f32.partialorder %v302, 0.0
    %v309 = vstv %s35
    %v310 = vmul.f32 %v309, %v287
    %v311 = vmul.f32 %v309, %v292
    %v312 = vmul.f32 %v309, %v297
    %v313 = vmul.f32 %v309, %v302
    %v314 = vsel %vm305, %v287, %v310
    %v315 = vsel %vm306, %v292, %v311
    %v316 = vsel %vm307, %v297, %v312
    %v317 = vsel %vm308, %v302, %v313
    %v318 = vld [vmem:[%s6] sm:$0xff]
    %v319 = vld [vmem:[%s7] sm:$0xff]
    %321 = vset.pattern.permute.xlu0 0
    %322 = vperm.xlu0 %321, %v319
    %v323 = vpop.permute.xlu0 %322
    %v326 = vsel %vm207, %v318, 0
    %328 = vmatprep.subr.mxu0 0.0
    %329 = vmatpush1.msra.mxu0 %v314
    %330 = vmatprep.subr.mxu0 0.0
    %331 = vmatpush1.msra.mxu0 %v315
    %332 = vmatprep.subr.mxu0 0.0
    %333 = vmatpush1.msra.mxu0 %v316
    %334 = vmatprep.subr.mxu0 0.0
    %335 = vmatpush1.msra.mxu0 %v317
    %336 = vmatprep.subr.mxu0 0.0
    %337 = vmatpush1.msra.mxu0 0.0
    %338 = vmatprep.subr.mxu0 0.0
    %339 = vmatpush1.msra.mxu0 0.0
    %340 = vmatprep.subr.mxu0 0.0
    %341 = vmatpush1.msra.mxu0 0.0
    %342 = vmatprep.subr.mxu0 0.0
    %343 = vmatpush1.msra.mxu0 0.0
    %344 = vmatprep.subr.mxu0 0.0
    %345 = vmatpush1.msra.mxu0 0.0
    %346 = vmatprep.subr.mxu0 0.0
    %347 = vmatpush1.msra.mxu0 0.0
    %348 = vmatprep.subr.mxu0 0.0
    %349 = vmatpush1.msra.mxu0 0.0
    %350 = vmatprep.subr.mxu0 0.0
    %351 = vmatpush1.msra.mxu0 0.0
    %352 = vmatprep.subr.mxu0 0.0
    %353 = vmatpush1.msra.mxu0 0.0
    %354 = vmatprep.subr.mxu0 0.0
    %355 = vmatpush1.msra.mxu0 0.0
    %356 = vmatprep.subr.mxu0 0.0
    %357 = vmatpush1.msra.mxu0 0.0
    %358 = vmatprep.subr.mxu0 0.0
    %359 = vmatpush1.msra.mxu0 0.0
    %360 = vmatprep.subr.mxu0 0.0
    %361 = vmatpush1.msra.mxu0 0.0
    %362 = vmatprep.subr.mxu0 0.0
    %363 = vmatpush1.msra.mxu0 0.0
    %364 = vmatprep.subr.mxu0 0.0
    %365 = vmatpush1.msra.mxu0 0.0
    %366 = vmatprep.subr.mxu0 0.0
    %367 = vmatpush1.msra.mxu0 0.0
    %368 = vmatprep.subr.mxu0 0.0
    %369 = vmatpush1.msra.mxu0 0.0
    %370 = vmatprep.subr.mxu0 0.0
    %371 = vmatpush1.msra.mxu0 0.0
    %372 = vmatprep.subr.mxu0 0.0
    %373 = vmatpush1.msra.mxu0 0.0
    %374 = vmatprep.subr.mxu0 0.0
    %375 = vmatpush1.msra.mxu0 0.0
    %376 = vmatprep.subr.mxu0 0.0
    %377 = vmatpush1.msra.mxu0 0.0
    %378 = vmatprep.subr.mxu0 0.0
    %379 = vmatpush1.msra.mxu0 0.0
    %380 = vmatprep.subr.mxu0 0.0
    %381 = vmatpush1.msra.mxu0 0.0
    %382 = vmatprep.subr.mxu0 0.0
    %383 = vmatpush1.msra.mxu0 0.0
    %384 = vmatprep.subr.mxu0 0.0
    %385 = vmatpush1.msra.mxu0 0.0
    %386 = vmatprep.subr.mxu0 0.0
    %387 = vmatpush1.msra.mxu0 0.0
    %388 = vmatprep.subr.mxu0 0.0
    %389 = vmatpush1.msra.mxu0 0.0
    %390 = vmatprep.subr.mxu0 0.0
    %391 = vmatpush1.msra.mxu0 0.0
    %392 = vmatprep.mubr.f32.mxu0 0.0
    %393 = vmatmul.mubr.f32.gmra.mrb[0].mxu0 %v326
    %v394 = vpop.f32.mrb[0].mxu0
    %v395 = vadd.f32 %v323, %v394
    %v396 = vpop.f32.mrb[0].mxu0
    %397 = vdwg.mxu0
    %vm398 = vcmask 64512
    %399 = vst.msk [vmem:[#allocation4] sm:$0xff] %vm398, %v395
    // Predicated region
    $region30: #{tpu_custom_call.1} parent=1 // pred_check
      _
    $region31: #{tpu_custom_call.1} parent=1 // pred_check_branch
      %401 = sbr.rel (0) target = $region33
    $region32: #{tpu_custom_call.1} parent=1 // pred_region
      %s403 = ssub.s32 128, 128
      %404 = vsyncadd [#allocation5], %s403
      %s406 = sshll.u32 [#allocation4], 4
      %s407 = int_to_ptr.vmem [resolvable:$true] %s406
      %409 = dma.vmem_to_hbm [thread:$0]  %s407, 128, %s8, [#allocation5]
    $region33: #{tpu_custom_call.1} parent=1 // pred_fallthru
      _
    // Predicated region
    $region34: #{tpu_custom_call.1} parent=1 // pred_check
      _
    $region35: #{tpu_custom_call.1} parent=1 // pred_check_branch
      %411 = sbr.rel (0) target = $region37
    $region36: #{tpu_custom_call.1} parent=1 // pred_region
      %412 = dma.done [#allocation5], 128
    $region37: #{tpu_custom_call.1} parent=1 // pred_fallthru
      _
    %413 = vsyncpa [#allocation5], 1

</llo_original>
